<compile_context>
chip_gen: v7x
topology: tpu7x:2x2x1
jax: 0.10.0
libtpu: 0.0.40
codegen_flags: <defaults>
</compile_context>

<pallas_src>
import functools

import jax
import jax.numpy as jnp
from jax.experimental import pallas as pl
from jax.experimental.pallas import tpu as pltpu


_VMEM_BUDGET = 40 * 2**20  # double-buffered working-set target (v7x-safe)


def _round_up(x, m):
    return (x + m - 1) // m * m


def _choose_tk(d_img, E):
    """Large K tile (2048-4096) to amortize per-grid-step cost; keep the
    double-buffered weight slice (2*tk*E*2B) modest for v7x's 64 MiB VMEM."""
    tk = min(_round_up(d_img, 128), 4096)
    while tk > 512 and 2 * tk * E * 2 > 8 * 2**20:
        tk = _round_up(tk // 2, 128)
    return tk


def _choose_tm(B, tk, d_txt, E, n_pad):
    """Batch tile: big (up to 512) to cut encoder-weight re-streams, >=2 tiles
    when B >= 32 (v7x dual TensorCore), rounded to 16 rows, VMEM-budgeted."""
    tm = min(_round_up(B, 16), 512)
    if B >= 32:
        tm = min(tm, _round_up((B + 1) // 2, 16))

    def est(t):
        return (2 * t * tk * 4          # f32 image activation block (double buf)
                + 2 * tk * E * 2        # bf16 encoder weight block
                + 2 * t * d_txt * 4     # f32 text block
                + 2 * d_txt * E * 2     # bf16 text weight (resident)
                + 2 * E * 4             # encoder bias
                + 2 * E * n_pad * 2     # head weight (resident)
                + 2 * n_pad * 4         # head bias
                + 2 * t * n_pad * 4     # f32 output block
                + t * E * 4)            # f32 accumulator scratch

    while tm > 16 and est(tm) > _VMEM_BUDGET:
        tm = _round_up(tm // 2, 16)
    return tm, est(tm)


def _model_kernel(x_ref, txt_ref, w_ref, wt_ref, bc_ref, wh_ref, bh_ref,
                  out_ref, acc_ref, *, d_img, tk, need_k_mask):
    """K-tiled fused encoder matmul -> L2 normalize -> head matmul."""
    k = pl.program_id(1)

    @pl.when(k == 0)
    def _():
        # Text branch of encode_multimodal: tiny contraction, once per batch
        # tile. Also serves as the accumulator init.
        txt = txt_ref[...].astype(wt_ref.dtype)          # f32 -> bf16 on VPU
        acc_ref[...] = jnp.dot(txt, wt_ref[...],
                               preferred_element_type=jnp.float32)

    # Image branch: streamed over the K grid axis. Activations arrive as f32
    # straight from HBM (no host-side copy) and are cast to bf16 here.
    x = x_ref[...]
    if need_k_mask:
        # Zero the out-of-bounds K tail of the last block (weights are
        # zero-padded at prep time, so both operands are clean).
        col = jax.lax.broadcasted_iota(jnp.int32, x.shape, 1)
        x = jnp.where(k * tk + col < d_img, x, 0.0)
    acc_ref[...] += jnp.dot(x.astype(w_ref.dtype), w_ref[...],
                            preferred_element_type=jnp.float32)

    @pl.when(k == pl.num_programs(1) - 1)
    def _():
        # Fused bias + L2 normalize (f32; reduce -> XLU, rsqrt -> EUP).
        fts = acc_ref[...] + bc_ref[...]
        inv_norm = jax.lax.rsqrt(
            jnp.sum(fts * fts, axis=-1, keepdims=True) + 1e-12)
        fts = fts * inv_norm
        # Classification head (lane-dense, 128-padded output).
        logits = jnp.dot(fts.astype(wh_ref.dtype), wh_ref[...],
                         preferred_element_type=jnp.float32) + bh_ref[...]
        out_ref[...] = logits.astype(out_ref.dtype)


def prepare_params(params):
    """One-time weight prep: transpose, K-zero-pad, 128-pad classes, bf16 cast."""
    E, d_img = params["w_img"].shape
    d_txt = params["w_txt"].shape[1]
    n_cls = params["w_head"].shape[0]

    tk = _choose_tk(d_img, E)
    k_pad = _round_up(d_img, tk)
    n_pad = _round_up(n_cls, 128)

    w_img = jnp.pad(params["w_img"].T,
                    ((0, k_pad - d_img), (0, 0))).astype(jnp.bfloat16)
    w_txt = params["w_txt"].T.astype(jnp.bfloat16)
    b_cat = (params["b_img"] + params["b_txt"]).astype(jnp.float32)[None, :]
    w_head = jnp.pad(params["w_head"].T,
                     ((0, 0), (0, n_pad - n_cls))).astype(jnp.bfloat16)
    b_head = jnp.pad(params["b_head"],
                     (0, n_pad - n_cls)).astype(jnp.float32)[None, :]

    return {"w_img": w_img, "w_txt": w_txt, "b_cat": b_cat,
            "w_head": w_head, "b_head": b_head}


def classification_forward(image, text, weights, *, n_cls):
    """image: [B, C, H, W] float32 (NCHW), text: [B, D_txt] float32."""
    B = image.shape[0]
    x_img = image.reshape(B, -1)           # NCHW flatten: free, no copy
    d_img = x_img.shape[1]
    d_txt = text.shape[1]

    w_img, w_txt = weights["w_img"], weights["w_txt"]
    b_cat, w_head, b_head = weights["b_cat"], weights["w_head"], weights["b_head"]
    k_pad, E = w_img.shape
    n_pad = w_head.shape[1]

    tk = _choose_tk(d_img, E)
    assert k_pad == _round_up(d_img, tk), "weights not prepared for this input size"
    nk = k_pad // tk

    tm, est = _choose_tm(B, tk, d_txt, E, n_pad)
    n_m = pl.cdiv(B, tm)
    b_pad = n_m * tm

    # Row-pad the batch only when needed (trace-time no-op otherwise). There is
    # NO host-side K-pad / concat / bf16 cast of the activations anymore.
    if b_pad != B:
        x_img = jnp.pad(x_img, ((0, b_pad - B), (0, 0)))
        text = jnp.pad(text, ((0, b_pad - B), (0, 0)))

    vmem_limit = int(min(max(2 * est, 32 * 2**20), 56 * 2**20))

    kernel = functools.partial(_model_kernel, d_img=d_img, tk=tk,
                               need_k_mask=(d_img % tk != 0))

    out = pl.pallas_call(
        kernel,
        out_shape=jax.ShapeDtypeStruct((b_pad, n_pad), jnp.float32),
        grid=(n_m, nk),
        in_specs=[
            pl.BlockSpec((tm, tk), lambda i, k: (i, k)),      # image acts (f32)
            pl.BlockSpec((tm, d_txt), lambda i, k: (i, 0)),   # text acts (f32)
            pl.BlockSpec((tk, E), lambda i, k: (k, 0)),       # image enc. weight
            pl.BlockSpec((d_txt, E), lambda i, k: (0, 0)),    # text enc. weight
            pl.BlockSpec((1, E), lambda i, k: (0, 0)),        # fused encoder bias
            pl.BlockSpec((E, n_pad), lambda i, k: (0, 0)),    # head weight
            pl.BlockSpec((1, n_pad), lambda i, k: (0, 0)),    # head bias
        ],
        out_specs=pl.BlockSpec((tm, n_pad), lambda i, k: (i, 0)),
        scratch_shapes=[pltpu.VMEM((tm, E), jnp.float32)],    # f32 accumulator
        compiler_params=pltpu.CompilerParams(
            # batch tiles shard across TensorCores; K axis is a reduction.
            dimension_semantics=("parallel", "arbitrary"),
            vmem_limit_bytes=vmem_limit),
    )(x_img, text, w_img, w_txt, b_cat, w_head, b_head)

    # Drop batch padding and class padding.
    return out[:B, :n_cls]


def _reference(image, text, params):
    """Pure-JAX f32 reference for sanity checking."""
    B = image.shape[0]
    x = image.reshape(B, -1)
    img_f = x @ params["w_img"].T + params["b_img"]
    txt_f = text @ params["w_txt"].T + params["b_txt"]
    fts = img_f + txt_f
    fts = fts / jnp.sqrt(jnp.sum(fts * fts, axis=-1, keepdims=True) + 1e-12)
    return fts @ params["w_head"].T + params["b_head"]


if __name__ == "__main__":
    # Small deterministic shapes consistent with the module's forward.
    B, C, H, W = 2, 4, 16, 16     # image: NCHW
    D_TXT = 32                    # text feature dim
    E = 128                       # shared embedding dim
    N_CLS = 16                    # number of classes

    key = jax.random.PRNGKey(0)
    k_img, k_txt, kwi, kbi, kwt, kbt, kwh, kbh = jax.random.split(key, 8)

    image = jax.random.normal(k_img, (B, C, H, W), dtype=jnp.float32)
    text = jax.random.normal(k_txt, (B, D_TXT), dtype=jnp.float32)

    d_img = C * H * W
    params = {
        "w_img": jax.random.normal(kwi, (E, d_img), jnp.float32) * 0.02,
        "b_img": jax.random.normal(kbi, (E,), jnp.float32) * 0.01,
        "w_txt": jax.random.normal(kwt, (E, D_TXT), jnp.float32) * 0.02,
        "b_txt": jax.random.normal(kbt, (E,), jnp.float32) * 0.01,
        "w_head": jax.random.normal(kwh, (N_CLS, E), jnp.float32) * 0.02,
        "b_head": jax.random.normal(kbh, (N_CLS,), jnp.float32) * 0.01,
    }

    # One-time weight preparation (transpose / pad / bf16 cast).
    weights = prepare_params(params)

    fwd = jax.jit(functools.partial(classification_forward, n_cls=N_CLS))
    logits = jax.block_until_ready(fwd(image, text, weights))

    ref = _reference(image, text, params)
    assert logits.shape == (B, N_CLS)
    # bf16 matmul operands (f32 accumulation) -> relaxed tolerance vs f32 ref.
    assert jnp.allclose(logits, ref, atol=2e-2, rtol=2e-2), "mismatch vs reference"

    print("KERNEL_OK")
</pallas_src>

<mosaic_0001>
module attributes {stable_mosaic.version = 11 : i64} {
  func.func @_model_kernel(%arg0: i32, %arg1: i32, %arg2: memref<16x1024xf32, #tpu.memory_space<vmem>>, %arg3: memref<16x32xf32, #tpu.memory_space<vmem>>, %arg4: memref<1024x128xbf16, #tpu.memory_space<vmem>>, %arg5: memref<32x128xbf16, #tpu.memory_space<vmem>>, %arg6: memref<1x128xf32, #tpu.memory_space<vmem>>, %arg7: memref<128x128xbf16, #tpu.memory_space<vmem>>, %arg8: memref<1x128xf32, #tpu.memory_space<vmem>>, %arg9: memref<16x128xf32, #tpu.memory_space<vmem>>, %arg10: memref<16x128xf32, #tpu.memory_space<vmem>>) attributes {dimension_semantics = [#tpu.dimension_semantics<parallel>, #tpu.dimension_semantics<arbitrary>], iteration_bounds = array<i64: 1, 1>, scalar_prefetch = 0 : i64, scratch_operands = 1 : i64, tpu.core_type = #tpu.core_type<tc>, window_params = [{transform_indices = @transform_0, window_bounds = array<i64: 16, 1024>}, {transform_indices = @transform_1, window_bounds = array<i64: 16, 32>}, {transform_indices = @transform_2, window_bounds = array<i64: 1024, 128>}, {pipeline_mode = #tpu.pipeline_mode<synchronous>, transform_indices = @transform_3, window_bounds = array<i64: 32, 128>}, {pipeline_mode = #tpu.pipeline_mode<synchronous>, transform_indices = @transform_4, window_bounds = array<i64: 1, 128>}, {pipeline_mode = #tpu.pipeline_mode<synchronous>, transform_indices = @transform_5, window_bounds = array<i64: 128, 128>}, {pipeline_mode = #tpu.pipeline_mode<synchronous>, transform_indices = @transform_6, window_bounds = array<i64: 1, 128>}, {transform_indices = @transform_7, window_bounds = array<i64: 16, 128>}]} {
    %c0_i32 = arith.constant 0 : i32
    %0 = arith.cmpi eq, %arg1, %c0_i32 : i32
    %1 = arith.extui %0 : i1 to i32
    %c0_i32_0 = arith.constant 0 : i32
    %2 = arith.cmpi ne, %1, %c0_i32_0 : i32
    scf.if %2 {
      %c0_10 = arith.constant 0 : index
      %c0_11 = arith.constant 0 : index
      %13 = vector.load %arg3[%c0_10, %c0_11] : memref<16x32xf32, #tpu.memory_space<vmem>>, vector<16x32xf32>
      %14 = arith.truncf %13 : vector<16x32xf32> to vector<16x32xbf16>
      %c0_12 = arith.constant 0 : index
      %c0_13 = arith.constant 0 : index
      %15 = vector.load %arg5[%c0_12, %c0_13] : memref<32x128xbf16, #tpu.memory_space<vmem>>, vector<32x128xbf16>
      %cst_14 = arith.constant dense<0.000000e+00> : vector<16x128xf32>
      %16 = tpu.matmul %14, %15, %cst_14 {dimension_numbers = #tpu.dot_dimension_numbers<[1], [0], [0], [1], [0, 0, 1, 1], [], []>} : vector<16x32xbf16>, vector<32x128xbf16>, vector<16x128xf32> -> vector<16x128xf32>
      %c0_15 = arith.constant 0 : index
      %c0_16 = arith.constant 0 : index
      %17 = vector.load %arg10[%c0_15, %c0_16] : memref<16x128xf32, #tpu.memory_space<vmem>>, vector<16x128xf32>
      tpu.vector_store %arg10[%c0_15, %c0_16], %16 {strides = array<i32>} : memref<16x128xf32, #tpu.memory_space<vmem>>, vector<16x128xf32>,
    } else {
    }
    %c0 = arith.constant 0 : index
    %c0_1 = arith.constant 0 : index
    %3 = vector.load %arg2[%c0, %c0_1] : memref<16x1024xf32, #tpu.memory_space<vmem>>, vector<16x1024xf32>
    %c0_2 = arith.constant 0 : index
    %c0_3 = arith.constant 0 : index
    %4 = vector.load %arg10[%c0_2, %c0_3] : memref<16x128xf32, #tpu.memory_space<vmem>>, vector<16x128xf32>
    %5 = arith.truncf %3 : vector<16x1024xf32> to vector<16x1024xbf16>
    %c0_4 = arith.constant 0 : index
    %c0_5 = arith.constant 0 : index
    %6 = vector.load %arg4[%c0_4, %c0_5] : memref<1024x128xbf16, #tpu.memory_space<vmem>>, vector<1024x128xbf16>
    %cst = arith.constant dense<0.000000e+00> : vector<16x128xf32>
    %7 = tpu.matmul %5, %6, %cst {dimension_numbers = #tpu.dot_dimension_numbers<[1], [0], [0], [1], [0, 0, 1, 1], [], []>} : vector<16x1024xbf16>, vector<1024x128xbf16>, vector<16x128xf32> -> vector<16x128xf32>
    %8 = arith.addf %4, %7 : vector<16x128xf32>
    %c0_6 = arith.constant 0 : index
    %c0_7 = arith.constant 0 : index
    %9 = vector.load %arg10[%c0_6, %c0_7] : memref<16x128xf32, #tpu.memory_space<vmem>>, vector<16x128xf32>
    tpu.vector_store %arg10[%c0_6, %c0_7], %8 {strides = array<i32>} : memref<16x128xf32, #tpu.memory_space<vmem>>, vector<16x128xf32>,
    %c0_i32_8 = arith.constant 0 : i32
    %10 = arith.cmpi eq, %arg1, %c0_i32_8 : i32
    %11 = arith.extui %10 : i1 to i32
    %c0_i32_9 = arith.constant 0 : i32
    %12 = arith.cmpi ne, %11, %c0_i32_9 : i32
    scf.if %12 {
      %c0_10 = arith.constant 0 : index
      %c0_11 = arith.constant 0 : index
      %13 = vector.load %arg10[%c0_10, %c0_11] : memref<16x128xf32, #tpu.memory_space<vmem>>, vector<16x128xf32>
      %c0_12 = arith.constant 0 : index
      %c0_13 = arith.constant 0 : index
      %14 = vector.load %arg6[%c0_12, %c0_13] : memref<1x128xf32, #tpu.memory_space<vmem>>, vector<1x128xf32>
      %15 = vector.broadcast %14 : vector<1x128xf32> to vector<16x128xf32>
      %16 = arith.addf %13, %15 : vector<16x128xf32>
      %17 = arith.mulf %16, %16 : vector<16x128xf32>
      %cst_14 = arith.constant dense<0.000000e+00> : vector<16xf32>
      %18 = vector.multi_reduction <add>, %17, %cst_14 [1] : vector<16x128xf32> to vector<16xf32>
      %19 = vector.shape_cast %18 : vector<16xf32> to vector<16x1xf32>
      %cst_15 = arith.constant 9.99999996E-13 : f32
      %20 = vector.broadcast %cst_15 : f32 to vector<16x1xf32>
      %21 = arith.addf %19, %20 : vector<16x1xf32>
      %22 = math.rsqrt %21 : vector<16x1xf32>
      %23 = vector.broadcast %22 : vector<16x1xf32> to vector<16x128xf32>
      %24 = arith.mulf %16, %23 : vector<16x128xf32>
      %25 = arith.truncf %24 : vector<16x128xf32> to vector<16x128xbf16>
      %c0_16 = arith.constant 0 : index
      %c0_17 = arith.constant 0 : index
      %26 = vector.load %arg7[%c0_16, %c0_17] : memref<128x128xbf16, #tpu.memory_space<vmem>>, vector<128x128xbf16>
      %cst_18 = arith.constant dense<0.000000e+00> : vector<16x128xf32>
      %27 = tpu.matmul %25, %26, %cst_18 {dimension_numbers = #tpu.dot_dimension_numbers<[1], [0], [0], [1], [0, 0, 1, 1], [], []>} : vector<16x128xbf16>, vector<128x128xbf16>, vector<16x128xf32> -> vector<16x128xf32>
      %c0_19 = arith.constant 0 : index
      %c0_20 = arith.constant 0 : index
      %28 = vector.load %arg8[%c0_19, %c0_20] : memref<1x128xf32, #tpu.memory_space<vmem>>, vector<1x128xf32>
      %29 = vector.broadcast %28 : vector<1x128xf32> to vector<16x128xf32>
      %30 = arith.addf %27, %29 : vector<16x128xf32>
      %c0_21 = arith.constant 0 : index
      %c0_22 = arith.constant 0 : index
      %31 = vector.load %arg9[%c0_21, %c0_22] : memref<16x128xf32, #tpu.memory_space<vmem>>, vector<16x128xf32>
      tpu.vector_store %arg9[%c0_21, %c0_22], %30 {strides = array<i32>} : memref<16x128xf32, #tpu.memory_space<vmem>>, vector<16x128xf32>,
    } else {
    }
    return
  }
  func.func @transform_0(%arg0: i32, %arg1: i32) -> (i32, i32) {
    %c0_i32 = arith.constant 0 : i32
    return %arg0, %arg1 : i32, i32
  }
  func.func @transform_1(%arg0: i32, %arg1: i32) -> (i32, i32) {
    %c0_i32 = arith.constant 0 : i32
    %c0_i32_0 = arith.constant 0 : i32
    return %arg0, %c0_i32 : i32, i32
  }
  func.func @transform_2(%arg0: i32, %arg1: i32) -> (i32, i32) {
    %c0_i32 = arith.constant 0 : i32
    %c0_i32_0 = arith.constant 0 : i32
    return %arg1, %c0_i32 : i32, i32
  }
  func.func @transform_3(%arg0: i32, %arg1: i32) -> (i32, i32) {
    %c0_i32 = arith.constant 0 : i32
    %c0_i32_0 = arith.constant 0 : i32
    %c0_i32_1 = arith.constant 0 : i32
    return %c0_i32, %c0_i32_0 : i32, i32
  }
  func.func @transform_4(%arg0: i32, %arg1: i32) -> (i32, i32) {
    %c0_i32 = arith.constant 0 : i32
    %c0_i32_0 = arith.constant 0 : i32
    %c0_i32_1 = arith.constant 0 : i32
    return %c0_i32, %c0_i32_0 : i32, i32
  }
  func.func @transform_5(%arg0: i32, %arg1: i32) -> (i32, i32) {
    %c0_i32 = arith.constant 0 : i32
    %c0_i32_0 = arith.constant 0 : i32
    %c0_i32_1 = arith.constant 0 : i32
    return %c0_i32, %c0_i32_0 : i32, i32
  }
  func.func @transform_6(%arg0: i32, %arg1: i32) -> (i32, i32) {
    %c0_i32 = arith.constant 0 : i32
    %c0_i32_0 = arith.constant 0 : i32
    %c0_i32_1 = arith.constant 0 : i32
    return %c0_i32, %c0_i32_0 : i32, i32
  }
  func.func @transform_7(%arg0: i32, %arg1: i32) -> (i32, i32) {
    %c0_i32 = arith.constant 0 : i32
    %c0_i32_0 = arith.constant 0 : i32
    return %arg0, %c0_i32 : i32, i32
  }
}

</mosaic_0001>

<llo_original>
// kernel: classification_forward.1
$region0: #{classification_forward.1}
  #allocation0 [shape = 'u32[]', space=smem, size = 0x4, offset = 0x4, fixed_abs, tag = 'smem constant byte address 0x4 - core index']
  #allocation1 [shape = 'u32[144,128]{1,0:T(1,128)}', space=vmem, size = 0x12000, scoped, tag = 'internal scratch']
  #allocation2 [shape = 'f32[16,128]{1,0:T(8,128)}', space=vmem, size = 0x2000, scoped, tag = 'scratch operand']
  %s0 = inlined_call_operand.vmem [shape: f32[16,1024], index: 0, kind: input, shape index: {}]
  %s1 = inlined_call_operand.vmem [shape: f32[16,32], index: 1, kind: input, shape index: {}]
  %s2 = inlined_call_operand.hbm [shape: bf16[1024,128], index: 2, kind: input, shape index: {}]
  %s3 = inlined_call_operand.vmem [shape: bf16[32,128], index: 3, kind: input, shape index: {}]
  %s4 = inlined_call_operand.vmem [shape: f32[1,128], index: 4, kind: input, shape index: {}]
  %s5 = inlined_call_operand.vmem [shape: bf16[128,128], index: 5, kind: input, shape index: {}]
  %s6 = inlined_call_operand.vmem [shape: f32[1,128], index: 6, kind: input, shape index: {}]
  %s7 = inlined_call_operand.vmem [shape: f32[16,128], index: 7, kind: output, shape index: {}]
  %s8 = sld [smem:[#allocation0]]
  $region50: #{classification_forward.1} parent=0
    _
  %s10 = ssub.s32 1, %s8
  %s11 = scalar_select 0, %s10, %s8
  $region1: #{classification_forward.1} parent=0
    #allocation3 [shape = 'u8[262144]{0}', space=vmem, size = 0x40000, scoped, tag = 'input window, operand 2, single buffered']
    #allocation4 [shape = 's32[1]{0}', space=sflag, size = 0x4, scoped, tag = 'scoped memory for classification_forward.1']
    %12 = vsyncpa [#allocation4], 0
    // Predicated region
    $region2: #{classification_forward.1} parent=1 // pred_check
      _
    $region3: #{classification_forward.1} parent=1 // pred_check_branch
      %14 = sbr.rel (0) target = $region5
    $region4: #{classification_forward.1} parent=1 // pred_region
      _
    $region5: #{classification_forward.1} parent=1 // pred_fallthru
      _
    // Predicated region
    $region6: #{classification_forward.1} parent=1 // pred_check
      _
    $region7: #{classification_forward.1} parent=1 // pred_check_branch
      %16 = sbr.rel (0) target = $region9
    $region8: #{classification_forward.1} parent=1 // pred_region
      _
    $region9: #{classification_forward.1} parent=1 // pred_fallthru
      _
    // Predicated region
    $region10: #{classification_forward.1} parent=1 // pred_check
      _
    $region11: #{classification_forward.1} parent=1 // pred_check_branch
      %18 = sbr.rel (0) target = $region13
    $region12: #{classification_forward.1} parent=1 // pred_region
      %s20 = ssub.s32 8192, 8192
      %21 = vsyncadd [#allocation4], %s20
      %s22 = sshll.u32 [#allocation3], 4
      %s23 = int_to_ptr.vmem [resolvable:$true] %s22
      %28 = dma.hbm_to_vmem [thread:$0]  %s2, 8192, %s23, [#allocation4], 64, 64, 4
    $region13: #{classification_forward.1} parent=1 // pred_fallthru
      _
    // Predicated region
    $region14: #{classification_forward.1} parent=1 // pred_check
      _
    $region15: #{classification_forward.1} parent=1 // pred_check_branch
      %30 = sbr.rel (0) target = $region17
    $region16: #{classification_forward.1} parent=1 // pred_region
      _
    $region17: #{classification_forward.1} parent=1 // pred_fallthru
      _
    // Predicated region
    $region18: #{classification_forward.1} parent=1 // pred_check
      _
    $region19: #{classification_forward.1} parent=1 // pred_check_branch
      %32 = sbr.rel (0) target = $region21
    $region20: #{classification_forward.1} parent=1 // pred_region
      _
    $region21: #{classification_forward.1} parent=1 // pred_fallthru
      _
    // Predicated region
    $region22: #{classification_forward.1} parent=1 // pred_check
      _
    $region23: #{classification_forward.1} parent=1 // pred_check_branch
      %34 = sbr.rel (0) target = $region25
    $region24: #{classification_forward.1} parent=1 // pred_region
      _
    $region25: #{classification_forward.1} parent=1 // pred_fallthru
      _
    // Predicated region
    $region26: #{classification_forward.1} parent=1 // pred_check
      _
    $region27: #{classification_forward.1} parent=1 // pred_check_branch
      %36 = sbr.rel (0) target = $region29
    $region28: #{classification_forward.1} parent=1 // pred_region
      _
    $region29: #{classification_forward.1} parent=1 // pred_fallthru
      _
    // Predicated region
    $region30: #{classification_forward.1} parent=1 // pred_check
      _
    $region31: #{classification_forward.1} parent=1 // pred_check_branch
      %38 = sbr.rel (0) target = $region33
    $region32: #{classification_forward.1} parent=1 // pred_region
      %39 = dma.done [#allocation4], 8192
    $region33: #{classification_forward.1} parent=1 // pred_fallthru
      _
    %p41 = scmp.eq.s32.totalorder 0, 0
    // Predicated region
    $region34: #{classification_forward.1} parent=1 // pred_check
      %p42 = pneg %p41
    $region35: #{classification_forward.1} parent=1 // pred_check_branch
      %44 = sbr.rel (%p42) target = $region37
    $region36: #{classification_forward.1} parent=1 // pred_region
      %v45 = vld [vmem:[%s1] sm:$0xff]
      %v46 = vld [vmem:[%s1 + $0x8] sm:$0xff]
      %v47 = vpack.c.bf16 %v46, %v45
      %v48 = vld [vmem:[%s3] sm:$0xf]
      %v49 = vld [vmem:[%s3 + $0x4] sm:$0xf]
      %v50 = vld [vmem:[%s3 + $0x8] sm:$0xf]
      %v51 = vld [vmem:[%s3 + $0xc] sm:$0xf]
      %v56 = vunpack.c.l.b16 %v48
      %v57 = vunpack.c.l.b16 %v49
      %v58 = vunpack.c.l.b16 %v50
      %v59 = vunpack.c.l.b16 %v51
      %v60 = vpack.c.b16 %v57, %v56
      %v61 = vpack.c.b16 %v59, %v58
      %vm64 = vcmask 261120
      %v66 = vsel %vm64, %v47, 0
      %68 = vmatprep.subr.bf16.mxu0 0
      %69 = vmatpush1.bf16.msra.mxu0 %v60
      %70 = vmatprep.subr.bf16.mxu0 0
      %71 = vmatpush1.bf16.msra.mxu0 %v61
      %72 = vmatprep.subr.bf16.mxu0 0
      %73 = vmatpush1.bf16.msra.mxu0 0
      %74 = vmatprep.subr.bf16.mxu0 0
      %75 = vmatpush1.bf16.msra.mxu0 0
      %76 = vmatprep.subr.bf16.mxu0 0
      %77 = vmatpush1.bf16.msra.mxu0 0
      %78 = vmatprep.subr.bf16.mxu0 0
      %79 = vmatpush1.bf16.msra.mxu0 0
      %80 = vmatprep.subr.bf16.mxu0 0
      %81 = vmatpush1.bf16.msra.mxu0 0
      %82 = vmatprep.subr.bf16.mxu0 0
      %83 = vmatpush1.bf16.msra.mxu0 0
      %84 = vmatprep.subr.bf16.mxu0 0
      %85 = vmatpush1.bf16.msra.mxu0 0
      %86 = vmatprep.subr.bf16.mxu0 0
      %87 = vmatpush1.bf16.msra.mxu0 0
      %88 = vmatprep.subr.bf16.mxu0 0
      %89 = vmatpush1.bf16.msra.mxu0 0
      %90 = vmatprep.subr.bf16.mxu0 0
      %91 = vmatpush1.bf16.msra.mxu0 0
      %92 = vmatprep.subr.bf16.mxu0 0
      %93 = vmatpush1.bf16.msra.mxu0 0
      %94 = vmatprep.subr.bf16.mxu0 0
      %95 = vmatpush1.bf16.msra.mxu0 0
      %96 = vmatprep.subr.bf16.mxu0 0
      %97 = vmatpush1.bf16.msra.mxu0 0
      %98 = vmatprep.subr.bf16.mxu0 0
      %99 = vmatpush1.bf16.msra.mxu0 0
      %100 = vmatprep.mubr.bf16.mxu0 0
      %101 = vmatmul.mubr.bf16.gmra.mrb[0].mxu0 %v66
      %v102 = vpop.f32.mrb[0].mxu0
      %v103 = vadd.f32 0.0, %v102
      %v104 = vpop.f32.mrb[0].mxu0
      %v105 = vpop.f32.mrb[0].mxu0
      %v106 = vadd.f32 0.0, %v105
      %v107 = vpop.f32.mrb[0].mxu0
      %108 = vdwg.mxu0
      %109 = vst [vmem:[#allocation2] sm:$0xff] %v103
      %110 = vst [vmem:[#allocation2 + $0x8] sm:$0xff] %v106
    $region37: #{classification_forward.1} parent=1 // pred_fallthru
      _
    %v111 = vld [vmem:[%s0] sm:$0xff]
    %v112 = vld [vmem:[%s0 + $0x8] sm:$0xff]
    %v113 = vld [vmem:[%s0 + $0x10] sm:$0xff]
    %v114 = vld [vmem:[%s0 + $0x18] sm:$0xff]
    %v115 = vld [vmem:[%s0 + $0x20] sm:$0xff]
    %v116 = vld [vmem:[%s0 + $0x28] sm:$0xff]
    %v117 = vld [vmem:[%s0 + $0x30] sm:$0xff]
    %v118 = vld [vmem:[%s0 + $0x38] sm:$0xff]
    %v119 = vld [vmem:[%s0 + $0x40] sm:$0xff]
    %v120 = vld [vmem:[%s0 + $0x48] sm:$0xff]
    %v121 = vld [vmem:[%s0 + $0x50] sm:$0xff]
    %v122 = vld [vmem:[%s0 + $0x58] sm:$0xff]
    %v123 = vld [vmem:[%s0 + $0x60] sm:$0xff]
    %v124 = vld [vmem:[%s0 + $0x68] sm:$0xff]
    %v125 = vld [vmem:[%s0 + $0x70] sm:$0xff]
    %v126 = vld [vmem:[%s0 + $0x78] sm:$0xff]
    %v127 = vld [vmem:[#allocation2] sm:$0xff]
    %v128 = vld [vmem:[#allocation2 + $0x8] sm:$0xff]
    %v129 = vpack.c.bf16 %v119, %v111
    %v130 = vpack.c.bf16 %v120, %v112
    %v131 = vpack.c.bf16 %v121, %v113
    %v132 = vpack.c.bf16 %v122, %v114
    %v133 = vpack.c.bf16 %v123, %v115
    %v134 = vpack.c.bf16 %v124, %v116
    %v135 = vpack.c.bf16 %v125, %v117
    %v136 = vpack.c.bf16 %v126, %v118
    %v137 = vld [vmem:[#allocation3] sm:$0xf]
    %v138 = vld [vmem:[#allocation3 + $0x4] sm:$0xf]
    %v139 = vld [vmem:[#allocation3 + $0x8] sm:$0xf]
    %v140 = vld [vmem:[#allocation3 + $0xc] sm:$0xf]
    %v141 = vld [vmem:[#allocation3 + $0x10] sm:$0xf]
    %v142 = vld [vmem:[#allocation3 + $0x14] sm:$0xf]
    %v143 = vld [vmem:[#allocation3 + $0x18] sm:$0xf]
    %v144 = vld [vmem:[#allocation3 + $0x1c] sm:$0xf]
    %v145 = vld [vmem:[#allocation3 + $0x20] sm:$0xf]
    %v146 = vld [vmem:[#allocation3 + $0x24] sm:$0xf]
    %v147 = vld [vmem:[#allocation3 + $0x28] sm:$0xf]
    %v148 = vld [vmem:[#allocation3 + $0x2c] sm:$0xf]
    %v149 = vld [vmem:[#allocation3 + $0x30] sm:$0xf]
    %v150 = vld [vmem:[#allocation3 + $0x34] sm:$0xf]
    %v151 = vld [vmem:[#allocation3 + $0x38] sm:$0xf]
    %v152 = vld [vmem:[#allocation3 + $0x3c] sm:$0xf]
    %v153 = vld [vmem:[#allocation3 + $0x40] sm:$0xf]
    %v154 = vld [vmem:[#allocation3 + $0x44] sm:$0xf]
    %v155 = vld [vmem:[#allocation3 + $0x48] sm:$0xf]
    %v156 = vld [vmem:[#allocation3 + $0x4c] sm:$0xf]
    %v157 = vld [vmem:[#allocation3 + $0x50] sm:$0xf]
    %v158 = vld [vmem:[#allocation3 + $0x54] sm:$0xf]
    %v159 = vld [vmem:[#allocation3 + $0x58] sm:$0xf]
    %v160 = vld [vmem:[#allocation3 + $0x5c] sm:$0xf]
    %v161 = vld [vmem:[#allocation3 + $0x60] sm:$0xf]
    %v162 = vld [vmem:[#allocation3 + $0x64] sm:$0xf]
    %v163 = vld [vmem:[#allocation3 + $0x68] sm:$0xf]
    %v164 = vld [vmem:[#allocation3 + $0x6c] sm:$0xf]
    %v165 = vld [vmem:[#allocation3 + $0x70] sm:$0xf]
    %v166 = vld [vmem:[#allocation3 + $0x74] sm:$0xf]
    %v167 = vld [vmem:[#allocation3 + $0x78] sm:$0xf]
    %v168 = vld [vmem:[#allocation3 + $0x7c] sm:$0xf]
    %v169 = vld [vmem:[#allocation3 + $0x80] sm:$0xf]
    %v170 = vld [vmem:[#allocation3 + $0x84] sm:$0xf]
    %v171 = vld [vmem:[#allocation3 + $0x88] sm:$0xf]
    %v172 = vld [vmem:[#allocation3 + $0x8c] sm:$0xf]
    %v173 = vld [vmem:[#allocation3 + $0x90] sm:$0xf]
    %v174 = vld [vmem:[#allocation3 + $0x94] sm:$0xf]
    %v175 = vld [vmem:[#allocation3 + $0x98] sm:$0xf]
    %v176 = vld [vmem:[#allocation3 + $0x9c] sm:$0xf]
    %v177 = vld [vmem:[#allocation3 + $0xa0] sm:$0xf]
    %v178 = vld [vmem:[#allocation3 + $0xa4] sm:$0xf]
    %v179 = vld [vmem:[#allocation3 + $0xa8] sm:$0xf]
    %v180 = vld [vmem:[#allocation3 + $0xac] sm:$0xf]
    %v181 = vld [vmem:[#allocation3 + $0xb0] sm:$0xf]
    %v182 = vld [vmem:[#allocation3 + $0xb4] sm:$0xf]
    %v183 = vld [vmem:[#allocation3 + $0xb8] sm:$0xf]
    %v184 = vld [vmem:[#allocation3 + $0xbc] sm:$0xf]
    %v185 = vld [vmem:[#allocation3 + $0xc0] sm:$0xf]
    %v186 = vld [vmem:[#allocation3 + $0xc4] sm:$0xf]
    %v187 = vld [vmem:[#allocation3 + $0xc8] sm:$0xf]
    %v188 = vld [vmem:[#allocation3 + $0xcc] sm:$0xf]
    %v189 = vld [vmem:[#allocation3 + $0xd0] sm:$0xf]
    %v190 = vld [vmem:[#allocation3 + $0xd4] sm:$0xf]
    %v191 = vld [vmem:[#allocation3 + $0xd8] sm:$0xf]
    %v192 = vld [vmem:[#allocation3 + $0xdc] sm:$0xf]
    %v193 = vld [vmem:[#allocation3 + $0xe0] sm:$0xf]
    %v194 = vld [vmem:[#allocation3 + $0xe4] sm:$0xf]
    %v195 = vld [vmem:[#allocation3 + $0xe8] sm:$0xf]
    %v196 = vld [vmem:[#allocation3 + $0xec] sm:$0xf]
    %v197 = vld [vmem:[#allocation3 + $0xf0] sm:$0xf]
    %v198 = vld [vmem:[#allocation3 + $0xf4] sm:$0xf]
    %v199 = vld [vmem:[#allocation3 + $0xf8] sm:$0xf]
    %v200 = vld [vmem:[#allocation3 + $0xfc] sm:$0xf]
    %v201 = vld [vmem:[#allocation3 + $0x100] sm:$0xf]
    %v202 = vld [vmem:[#allocation3 + $0x104] sm:$0xf]
    %v203 = vld [vmem:[#allocation3 + $0x108] sm:$0xf]
    %v204 = vld [vmem:[#allocation3 + $0x10c] sm:$0xf]
    %v205 = vld [vmem:[#allocation3 + $0x110] sm:$0xf]
    %v206 = vld [vmem:[#allocation3 + $0x114] sm:$0xf]
    %v207 = vld [vmem:[#allocation3 + $0x118] sm:$0xf]
    %v208 = vld [vmem:[#allocation3 + $0x11c] sm:$0xf]
    %v209 = vld [vmem:[#allocation3 + $0x120] sm:$0xf]
    %v210 = vld [vmem:[#allocation3 + $0x124] sm:$0xf]
    %v211 = vld [vmem:[#allocation3 + $0x128] sm:$0xf]
    %v212 = vld [vmem:[#allocation3 + $0x12c] sm:$0xf]
    %v213 = vld [vmem:[#allocation3 + $0x130] sm:$0xf]
    %v214 = vld [vmem:[#allocation3 + $0x134] sm:$0xf]
    %v215 = vld [vmem:[#allocation3 + $0x138] sm:$0xf]
    %v216 = vld [vmem:[#allocation3 + $0x13c] sm:$0xf]
    %v217 = vld [vmem:[#allocation3 + $0x140] sm:$0xf]
    %v218 = vld [vmem:[#allocation3 + $0x144] sm:$0xf]
    %v219 = vld [vmem:[#allocation3 + $0x148] sm:$0xf]
    %v220 = vld [vmem:[#allocation3 + $0x14c] sm:$0xf]
    %v221 = vld [vmem:[#allocation3 + $0x150] sm:$0xf]
    %v222 = vld [vmem:[#allocation3 + $0x154] sm:$0xf]
    %v223 = vld [vmem:[#allocation3 + $0x158] sm:$0xf]
    %v224 = vld [vmem:[#allocation3 + $0x15c] sm:$0xf]
    %v225 = vld [vmem:[#allocation3 + $0x160] sm:$0xf]
    %v226 = vld [vmem:[#allocation3 + $0x164] sm:$0xf]
    %v227 = vld [vmem:[#allocation3 + $0x168] sm:$0xf]
    %v228 = vld [vmem:[#allocation3 + $0x16c] sm:$0xf]
    %v229 = vld [vmem:[#allocation3 + $0x170] sm:$0xf]
    %v230 = vld [vmem:[#allocation3 + $0x174] sm:$0xf]
    %v231 = vld [vmem:[#allocation3 + $0x178] sm:$0xf]
    %v232 = vld [vmem:[#allocation3 + $0x17c] sm:$0xf]
    %v233 = vld [vmem:[#allocation3 + $0x180] sm:$0xf]
    %v234 = vld [vmem:[#allocation3 + $0x184] sm:$0xf]
    %v235 = vld [vmem:[#allocation3 + $0x188] sm:$0xf]
    %v236 = vld [vmem:[#allocation3 + $0x18c] sm:$0xf]
    %v237 = vld [vmem:[#allocation3 + $0x190] sm:$0xf]
    %v238 = vld [vmem:[#allocation3 + $0x194] sm:$0xf]
    %v239 = vld [vmem:[#allocation3 + $0x198] sm:$0xf]
    %v240 = vld [vmem:[#allocation3 + $0x19c] sm:$0xf]
    %v241 = vld [vmem:[#allocation3 + $0x1a0] sm:$0xf]
    %v242 = vld [vmem:[#allocation3 + $0x1a4] sm:$0xf]
    %v243 = vld [vmem:[#allocation3 + $0x1a8] sm:$0xf]
    %v244 = vld [vmem:[#allocation3 + $0x1ac] sm:$0xf]
    %v245 = vld [vmem:[#allocation3 + $0x1b0] sm:$0xf]
    %v246 = vld [vmem:[#allocation3 + $0x1b4] sm:$0xf]
    %v247 = vld [vmem:[#allocation3 + $0x1b8] sm:$0xf]
    %v248 = vld [vmem:[#allocation3 + $0x1bc] sm:$0xf]
    %v249 = vld [vmem:[#allocation3 + $0x1c0] sm:$0xf]
    %v250 = vld [vmem:[#allocation3 + $0x1c4] sm:$0xf]
    %v251 = vld [vmem:[#allocation3 + $0x1c8] sm:$0xf]
    %v252 = vld [vmem:[#allocation3 + $0x1cc] sm:$0xf]
    %v253 = vld [vmem:[#allocation3 + $0x1d0] sm:$0xf]
    %v254 = vld [vmem:[#allocation3 + $0x1d4] sm:$0xf]
    %v255 = vld [vmem:[#allocation3 + $0x1d8] sm:$0xf]
    %v256 = vld [vmem:[#allocation3 + $0x1dc] sm:$0xf]
    %v257 = vld [vmem:[#allocation3 + $0x1e0] sm:$0xf]
    %v258 = vld [vmem:[#allocation3 + $0x1e4] sm:$0xf]
    %v259 = vld [vmem:[#allocation3 + $0x1e8] sm:$0xf]
    %v260 = vld [vmem:[#allocation3 + $0x1ec] sm:$0xf]
    %v261 = vld [vmem:[#allocation3 + $0x1f0] sm:$0xf]
    %v262 = vld [vmem:[#allocation3 + $0x1f4] sm:$0xf]
    %v263 = vld [vmem:[#allocation3 + $0x1f8] sm:$0xf]
    %v264 = vld [vmem:[#allocation3 + $0x1fc] sm:$0xf]
    %v393 = vunpack.c.l.b16 %v137
    %v394 = vunpack.c.l.b16 %v138
    %v395 = vunpack.c.l.b16 %v139
    %v396 = vunpack.c.l.b16 %v140
    %v397 = vunpack.c.l.b16 %v141
    %v398 = vunpack.c.l.b16 %v142
    %v399 = vunpack.c.l.b16 %v143
    %v400 = vunpack.c.l.b16 %v144
    %v401 = vunpack.c.l.b16 %v145
    %v402 = vunpack.c.l.b16 %v146
    %v403 = vunpack.c.l.b16 %v147
    %v404 = vunpack.c.l.b16 %v148
    %v405 = vunpack.c.l.b16 %v149
    %v406 = vunpack.c.l.b16 %v150
    %v407 = vunpack.c.l.b16 %v151
    %v408 = vunpack.c.l.b16 %v152
    %v409 = vunpack.c.l.b16 %v153
    %v410 = vunpack.c.l.b16 %v154
    %v411 = vunpack.c.l.b16 %v155
    %v412 = vunpack.c.l.b16 %v156
    %v413 = vunpack.c.l.b16 %v157
    %v414 = vunpack.c.l.b16 %v158
    %v415 = vunpack.c.l.b16 %v159
    %v416 = vunpack.c.l.b16 %v160
    %v417 = vunpack.c.l.b16 %v161
    %v418 = vunpack.c.l.b16 %v162
    %v419 = vunpack.c.l.b16 %v163
    %v420 = vunpack.c.l.b16 %v164
    %v421 = vunpack.c.l.b16 %v165
    %v422 = vunpack.c.l.b16 %v166
    %v423 = vunpack.c.l.b16 %v167
    %v424 = vunpack.c.l.b16 %v168
    %v425 = vunpack.c.l.b16 %v169
    %v426 = vunpack.c.l.b16 %v170
    %v427 = vunpack.c.l.b16 %v171
    %v428 = vunpack.c.l.b16 %v172
    %v429 = vunpack.c.l.b16 %v173
    %v430 = vunpack.c.l.b16 %v174
    %v431 = vunpack.c.l.b16 %v175
    %v432 = vunpack.c.l.b16 %v176
    %v433 = vunpack.c.l.b16 %v177
    %v434 = vunpack.c.l.b16 %v178
    %v435 = vunpack.c.l.b16 %v179
    %v436 = vunpack.c.l.b16 %v180
    %v437 = vunpack.c.l.b16 %v181
    %v438 = vunpack.c.l.b16 %v182
    %v439 = vunpack.c.l.b16 %v183
    %v440 = vunpack.c.l.b16 %v184
    %v441 = vunpack.c.l.b16 %v185
    %v442 = vunpack.c.l.b16 %v186
    %v443 = vunpack.c.l.b16 %v187
    %v444 = vunpack.c.l.b16 %v188
    %v445 = vunpack.c.l.b16 %v189
    %v446 = vunpack.c.l.b16 %v190
    %v447 = vunpack.c.l.b16 %v191
    %v448 = vunpack.c.l.b16 %v192
    %v449 = vunpack.c.l.b16 %v193
    %v450 = vunpack.c.l.b16 %v194
    %v451 = vunpack.c.l.b16 %v195
    %v452 = vunpack.c.l.b16 %v196
    %v453 = vunpack.c.l.b16 %v197
    %v454 = vunpack.c.l.b16 %v198
    %v455 = vunpack.c.l.b16 %v199
    %v456 = vunpack.c.l.b16 %v200
    %v457 = vunpack.c.l.b16 %v201
    %v458 = vunpack.c.l.b16 %v202
    %v459 = vunpack.c.l.b16 %v203
    %v460 = vunpack.c.l.b16 %v204
    %v461 = vunpack.c.l.b16 %v205
    %v462 = vunpack.c.l.b16 %v206
    %v463 = vunpack.c.l.b16 %v207
    %v464 = vunpack.c.l.b16 %v208
    %v465 = vunpack.c.l.b16 %v209
    %v466 = vunpack.c.l.b16 %v210
    %v467 = vunpack.c.l.b16 %v211
    %v468 = vunpack.c.l.b16 %v212
    %v469 = vunpack.c.l.b16 %v213
    %v470 = vunpack.c.l.b16 %v214
    %v471 = vunpack.c.l.b16 %v215
    %v472 = vunpack.c.l.b16 %v216
    %v473 = vunpack.c.l.b16 %v217
    %v474 = vunpack.c.l.b16 %v218
    %v475 = vunpack.c.l.b16 %v219
    %v476 = vunpack.c.l.b16 %v220
    %v477 = vunpack.c.l.b16 %v221
    %v478 = vunpack.c.l.b16 %v222
    %v479 = vunpack.c.l.b16 %v223
    %v480 = vunpack.c.l.b16 %v224
    %v481 = vunpack.c.l.b16 %v225
    %v482 = vunpack.c.l.b16 %v226
    %v483 = vunpack.c.l.b16 %v227
    %v484 = vunpack.c.l.b16 %v228
    %v485 = vunpack.c.l.b16 %v229
    %v486 = vunpack.c.l.b16 %v230
    %v487 = vunpack.c.l.b16 %v231
    %v488 = vunpack.c.l.b16 %v232
    %v489 = vunpack.c.l.b16 %v233
    %v490 = vunpack.c.l.b16 %v234
    %v491 = vunpack.c.l.b16 %v235
    %v492 = vunpack.c.l.b16 %v236
    %v493 = vunpack.c.l.b16 %v237
    %v494 = vunpack.c.l.b16 %v238
    %v495 = vunpack.c.l.b16 %v239
    %v496 = vunpack.c.l.b16 %v240
    %v497 = vunpack.c.l.b16 %v241
    %v498 = vunpack.c.l.b16 %v242
    %v499 = vunpack.c.l.b16 %v243
    %v500 = vunpack.c.l.b16 %v244
    %v501 = vunpack.c.l.b16 %v245
    %v502 = vunpack.c.l.b16 %v246
    %v503 = vunpack.c.l.b16 %v247
    %v504 = vunpack.c.l.b16 %v248
    %v505 = vunpack.c.l.b16 %v249
    %v506 = vunpack.c.l.b16 %v250
    %v507 = vunpack.c.l.b16 %v251
    %v508 = vunpack.c.l.b16 %v252
    %v509 = vunpack.c.l.b16 %v253
    %v510 = vunpack.c.l.b16 %v254
    %v511 = vunpack.c.l.b16 %v255
    %v512 = vunpack.c.l.b16 %v256
    %v513 = vunpack.c.l.b16 %v257
    %v514 = vunpack.c.l.b16 %v258
    %v515 = vunpack.c.l.b16 %v259
    %v516 = vunpack.c.l.b16 %v260
    %v517 = vunpack.c.l.b16 %v261
    %v518 = vunpack.c.l.b16 %v262
    %v519 = vunpack.c.l.b16 %v263
    %v520 = vunpack.c.l.b16 %v264
    %v521 = vpack.c.b16 %v394, %v393
    %v522 = vpack.c.b16 %v396, %v395
    %v523 = vpack.c.b16 %v398, %v397
    %v524 = vpack.c.b16 %v400, %v399
    %v525 = vpack.c.b16 %v402, %v401
    %v526 = vpack.c.b16 %v404, %v403
    %v527 = vpack.c.b16 %v406, %v405
    %v528 = vpack.c.b16 %v408, %v407
    %v529 = vpack.c.b16 %v410, %v409
    %v530 = vpack.c.b16 %v412, %v411
    %v531 = vpack.c.b16 %v414, %v413
    %v532 = vpack.c.b16 %v416, %v415
    %v533 = vpack.c.b16 %v418, %v417
    %v534 = vpack.c.b16 %v420, %v419
    %v535 = vpack.c.b16 %v422, %v421
    %v536 = vpack.c.b16 %v424, %v423
    %v537 = vpack.c.b16 %v426, %v425
    %v538 = vpack.c.b16 %v428, %v427
    %v539 = vpack.c.b16 %v430, %v429
    %v540 = vpack.c.b16 %v432, %v431
    %v541 = vpack.c.b16 %v434, %v433
    %v542 = vpack.c.b16 %v436, %v435
    %v543 = vpack.c.b16 %v438, %v437
    %v544 = vpack.c.b16 %v440, %v439
    %v545 = vpack.c.b16 %v442, %v441
    %v546 = vpack.c.b16 %v444, %v443
    %v547 = vpack.c.b16 %v446, %v445
    %v548 = vpack.c.b16 %v448, %v447
    %v549 = vpack.c.b16 %v450, %v449
    %v550 = vpack.c.b16 %v452, %v451
    %v551 = vpack.c.b16 %v454, %v453
    %v552 = vpack.c.b16 %v456, %v455
    %v553 = vpack.c.b16 %v458, %v457
    %v554 = vpack.c.b16 %v460, %v459
    %v555 = vpack.c.b16 %v462, %v461
    %v556 = vpack.c.b16 %v464, %v463
    %v557 = vpack.c.b16 %v466, %v465
    %v558 = vpack.c.b16 %v468, %v467
    %v559 = vpack.c.b16 %v470, %v469
    %v560 = vpack.c.b16 %v472, %v471
    %v561 = vpack.c.b16 %v474, %v473
    %v562 = vpack.c.b16 %v476, %v475
    %v563 = vpack.c.b16 %v478, %v477
    %v564 = vpack.c.b16 %v480, %v479
    %v565 = vpack.c.b16 %v482, %v481
    %v566 = vpack.c.b16 %v484, %v483
    %v567 = vpack.c.b16 %v486, %v485
    %v568 = vpack.c.b16 %v488, %v487
    %v569 = vpack.c.b16 %v490, %v489
    %v570 = vpack.c.b16 %v492, %v491
    %v571 = vpack.c.b16 %v494, %v493
    %v572 = vpack.c.b16 %v496, %v495
    %v573 = vpack.c.b16 %v498, %v497
    %v574 = vpack.c.b16 %v500, %v499
    %v575 = vpack.c.b16 %v502, %v501
    %v576 = vpack.c.b16 %v504, %v503
    %v577 = vpack.c.b16 %v506, %v505
    %v578 = vpack.c.b16 %v508, %v507
    %v579 = vpack.c.b16 %v510, %v509
    %v580 = vpack.c.b16 %v512, %v511
    %v581 = vpack.c.b16 %v514, %v513
    %v582 = vpack.c.b16 %v516, %v515
    %v583 = vpack.c.b16 %v518, %v517
    %v584 = vpack.c.b16 %v520, %v519
    %649 = vmatprep.subr.bf16.mxu0 0
    %650 = vmatpush1.bf16.msra.mxu0 %v521
    %651 = vmatprep.subr.bf16.mxu0 0
    %652 = vmatpush1.bf16.msra.mxu0 %v522
    %653 = vmatprep.subr.bf16.mxu0 0
    %654 = vmatpush1.bf16.msra.mxu0 %v523
    %655 = vmatprep.subr.bf16.mxu0 0
    %656 = vmatpush1.bf16.msra.mxu0 %v524
    %657 = vmatprep.subr.bf16.mxu0 0
    %658 = vmatpush1.bf16.msra.mxu0 %v525
    %659 = vmatprep.subr.bf16.mxu0 0
    %660 = vmatpush1.bf16.msra.mxu0 %v526
    %661 = vmatprep.subr.bf16.mxu0 0
    %662 = vmatpush1.bf16.msra.mxu0 %v527
    %663 = vmatprep.subr.bf16.mxu0 0
    %664 = vmatpush1.bf16.msra.mxu0 %v528
    %665 = vmatprep.subr.bf16.mxu0 0
    %666 = vmatpush1.bf16.msra.mxu0 %v529
    %667 = vmatprep.subr.bf16.mxu0 0
    %668 = vmatpush1.bf16.msra.mxu0 %v530
    %669 = vmatprep.subr.bf16.mxu0 0
    %670 = vmatpush1.bf16.msra.mxu0 %v531
    %671 = vmatprep.subr.bf16.mxu0 0
    %672 = vmatpush1.bf16.msra.mxu0 %v532
    %673 = vmatprep.subr.bf16.mxu0 0
    %674 = vmatpush1.bf16.msra.mxu0 %v533
    %675 = vmatprep.subr.bf16.mxu0 0
    %676 = vmatpush1.bf16.msra.mxu0 %v534
    %677 = vmatprep.subr.bf16.mxu0 0
    %678 = vmatpush1.bf16.msra.mxu0 %v535
    %679 = vmatprep.subr.bf16.mxu0 0
    %680 = vmatpush1.bf16.msra.mxu0 %v536
    %681 = vmatprep.mubr.bf16.mxu0 %v130
    %682 = vmatmul.mubr.bf16.gmra.mrb[0].mxu0 %v129
    %v683 = vpop.f32.mrb[0].mxu0
    %v684 = vadd.f32 0.0, %v683
    %v685 = vpop.f32.mrb[0].mxu0
    %v686 = vpop.f32.mrb[0].mxu0
    %v687 = vadd.f32 0.0, %v686
    %v688 = vpop.f32.mrb[0].mxu0
    %689 = vdwg.mxu0
    %690 = vmatprep.subr.bf16.mxu0 0
    %691 = vmatpush1.bf16.msra.mxu0 %v537
    %692 = vmatprep.subr.bf16.mxu0 0
    %693 = vmatpush1.bf16.msra.mxu0 %v538
    %694 = vmatprep.subr.bf16.mxu0 0
    %695 = vmatpush1.bf16.msra.mxu0 %v539
    %696 = vmatprep.subr.bf16.mxu0 0
    %697 = vmatpush1.bf16.msra.mxu0 %v540
    %698 = vmatprep.subr.bf16.mxu0 0
    %699 = vmatpush1.bf16.msra.mxu0 %v541
    %700 = vmatprep.subr.bf16.mxu0 0
    %701 = vmatpush1.bf16.msra.mxu0 %v542
    %702 = vmatprep.subr.bf16.mxu0 0
    %703 = vmatpush1.bf16.msra.mxu0 %v543
    %704 = vmatprep.subr.bf16.mxu0 0
    %705 = vmatpush1.bf16.msra.mxu0 %v544
    %706 = vmatprep.subr.bf16.mxu0 0
    %707 = vmatpush1.bf16.msra.mxu0 %v545
    %708 = vmatprep.subr.bf16.mxu0 0
    %709 = vmatpush1.bf16.msra.mxu0 %v546
    %710 = vmatprep.subr.bf16.mxu0 0
    %711 = vmatpush1.bf16.msra.mxu0 %v547
    %712 = vmatprep.subr.bf16.mxu0 0
    %713 = vmatpush1.bf16.msra.mxu0 %v548
    %714 = vmatprep.subr.bf16.mxu0 0
    %715 = vmatpush1.bf16.msra.mxu0 %v549
    %716 = vmatprep.subr.bf16.mxu0 0
    %717 = vmatpush1.bf16.msra.mxu0 %v550
    %718 = vmatprep.subr.bf16.mxu0 0
    %719 = vmatpush1.bf16.msra.mxu0 %v551
    %720 = vmatprep.subr.bf16.mxu0 0
    %721 = vmatpush1.bf16.msra.mxu0 %v552
    %722 = vmatprep.mubr.bf16.mxu0 %v132
    %723 = vmatmul.mubr.bf16.gmra.mrb[0].mxu0 %v131
    %v724 = vpop.f32.mrb[0].mxu0
    %v725 = vadd.f32 %v684, %v724
    %v726 = vpop.f32.mrb[0].mxu0
    %v727 = vpop.f32.mrb[0].mxu0
    %v728 = vadd.f32 %v687, %v727
    %v729 = vpop.f32.mrb[0].mxu0
    %730 = vdwg.mxu0
    %731 = vmatprep.subr.bf16.mxu0 0
    %732 = vmatpush1.bf16.msra.mxu0 %v553
    %733 = vmatprep.subr.bf16.mxu0 0
    %734 = vmatpush1.bf16.msra.mxu0 %v554
    %735 = vmatprep.subr.bf16.mxu0 0
    %736 = vmatpush1.bf16.msra.mxu0 %v555
    %737 = vmatprep.subr.bf16.mxu0 0
    %738 = vmatpush1.bf16.msra.mxu0 %v556
    %739 = vmatprep.subr.bf16.mxu0 0
    %740 = vmatpush1.bf16.msra.mxu0 %v557
    %741 = vmatprep.subr.bf16.mxu0 0
    %742 = vmatpush1.bf16.msra.mxu0 %v558
    %743 = vmatprep.subr.bf16.mxu0 0
    %744 = vmatpush1.bf16.msra.mxu0 %v559
    %745 = vmatprep.subr.bf16.mxu0 0
    %746 = vmatpush1.bf16.msra.mxu0 %v560
    %747 = vmatprep.subr.bf16.mxu0 0
    %748 = vmatpush1.bf16.msra.mxu0 %v561
    %749 = vmatprep.subr.bf16.mxu0 0
    %750 = vmatpush1.bf16.msra.mxu0 %v562
    %751 = vmatprep.subr.bf16.mxu0 0
    %752 = vmatpush1.bf16.msra.mxu0 %v563
    %753 = vmatprep.subr.bf16.mxu0 0
    %754 = vmatpush1.bf16.msra.mxu0 %v564
    %755 = vmatprep.subr.bf16.mxu0 0
    %756 = vmatpush1.bf16.msra.mxu0 %v565
    %757 = vmatprep.subr.bf16.mxu0 0
    %758 = vmatpush1.bf16.msra.mxu0 %v566
    %759 = vmatprep.subr.bf16.mxu0 0
    %760 = vmatpush1.bf16.msra.mxu0 %v567
    %761 = vmatprep.subr.bf16.mxu0 0
    %762 = vmatpush1.bf16.msra.mxu0 %v568
    %763 = vmatprep.mubr.bf16.mxu0 %v134
    %764 = vmatmul.mubr.bf16.gmra.mrb[0].mxu0 %v133
    %v765 = vpop.f32.mrb[0].mxu0
    %v766 = vadd.f32 %v725, %v765
    %v767 = vpop.f32.mrb[0].mxu0
    %v768 = vpop.f32.mrb[0].mxu0
    %v769 = vadd.f32 %v728, %v768
    %v770 = vpop.f32.mrb[0].mxu0
    %771 = vdwg.mxu0
    %772 = vmatprep.subr.bf16.mxu0 0
    %773 = vmatpush1.bf16.msra.mxu0 %v569
    %774 = vmatprep.subr.bf16.mxu0 0
    %775 = vmatpush1.bf16.msra.mxu0 %v570
    %776 = vmatprep.subr.bf16.mxu0 0
    %777 = vmatpush1.bf16.msra.mxu0 %v571
    %778 = vmatprep.subr.bf16.mxu0 0
    %779 = vmatpush1.bf16.msra.mxu0 %v572
    %780 = vmatprep.subr.bf16.mxu0 0
    %781 = vmatpush1.bf16.msra.mxu0 %v573
    %782 = vmatprep.subr.bf16.mxu0 0
    %783 = vmatpush1.bf16.msra.mxu0 %v574
    %784 = vmatprep.subr.bf16.mxu0 0
    %785 = vmatpush1.bf16.msra.mxu0 %v575
    %786 = vmatprep.subr.bf16.mxu0 0
    %787 = vmatpush1.bf16.msra.mxu0 %v576
    %788 = vmatprep.subr.bf16.mxu0 0
    %789 = vmatpush1.bf16.msra.mxu0 %v577
    %790 = vmatprep.subr.bf16.mxu0 0
    %791 = vmatpush1.bf16.msra.mxu0 %v578
    %792 = vmatprep.subr.bf16.mxu0 0
    %793 = vmatpush1.bf16.msra.mxu0 %v579
    %794 = vmatprep.subr.bf16.mxu0 0
    %795 = vmatpush1.bf16.msra.mxu0 %v580
    %796 = vmatprep.subr.bf16.mxu0 0
    %797 = vmatpush1.bf16.msra.mxu0 %v581
    %798 = vmatprep.subr.bf16.mxu0 0
    %799 = vmatpush1.bf16.msra.mxu0 %v582
    %800 = vmatprep.subr.bf16.mxu0 0
    %801 = vmatpush1.bf16.msra.mxu0 %v583
    %802 = vmatprep.subr.bf16.mxu0 0
    %803 = vmatpush1.bf16.msra.mxu0 %v584
    %804 = vmatprep.mubr.bf16.mxu0 %v136
    %805 = vmatmul.mubr.bf16.gmra.mrb[0].mxu0 %v135
    %v806 = vpop.f32.mrb[0].mxu0
    %v807 = vadd.f32 %v766, %v806
    %v808 = vpop.f32.mrb[0].mxu0
    %v809 = vpop.f32.mrb[0].mxu0
    %v810 = vadd.f32 %v769, %v809
    %v811 = vpop.f32.mrb[0].mxu0
    %812 = vdwg.mxu0
    %v813 = vadd.f32 %v127, %v807
    %v814 = vadd.f32 %v128, %v810
    %815 = vst [vmem:[#allocation2] sm:$0xff] %v813
    %816 = vst [vmem:[#allocation2 + $0x8] sm:$0xff] %v814
    // Predicated region
    $region38: #{classification_forward.1} parent=1 // pred_check
      %p817 = pneg %p41
    $region39: #{classification_forward.1} parent=1 // pred_check_branch
      %819 = sbr.rel (%p817) target = $region41
    $region40: #{classification_forward.1} parent=1 // pred_region
      %v820 = vld [vmem:[#allocation2] sm:$0xff]
      %v821 = vld [vmem:[#allocation2 + $0x8] sm:$0xff]
      %v822 = vld [vmem:[%s4] sm:$0x1]
      %v824 = vlaneseq
      %v825 = vshrl.u32 %v824, 7
      %v826 = vsub.s32 0, %v825
      %v827 = vrot.slane %v822, %v826
      %v829 = vadd.f32 %v820, %v827
      %v830 = vadd.f32 %v821, %v827
      %v831 = vmul.f32 %v829, %v829
      %v832 = vmul.f32 %v830, %v830
      %833 = vadd.xlane.f32.xlu0 %v831
      %v834 = vpop.xlane.xlu0 %833
      %835 = vadd.xlane.f32.xlu0 %v832
      %v836 = vpop.xlane.xlu0 %835
      %v837 = vadd.f32 %v834, 1e-12
      %v838 = vadd.f32 %v836, 1e-12
      %v839 = vrsqrt.pop %v837
      %v840 = vrsqrt.pop %v838
      %v841 = vmul.f32 %v829, %v839
      %v842 = vmul.f32 %v830, %v840
      %v843 = vpack.c.bf16 %v842, %v841
      %v844 = vld [vmem:[%s5] sm:$0xf]
      %v845 = vld [vmem:[%s5 + $0x4] sm:$0xf]
      %v846 = vld [vmem:[%s5 + $0x8] sm:$0xf]
      %v847 = vld [vmem:[%s5 + $0xc] sm:$0xf]
      %v848 = vld [vmem:[%s5 + $0x10] sm:$0xf]
      %v849 = vld [vmem:[%s5 + $0x14] sm:$0xf]
      %v850 = vld [vmem:[%s5 + $0x18] sm:$0xf]
      %v851 = vld [vmem:[%s5 + $0x1c] sm:$0xf]
      %v852 = vld [vmem:[%s5 + $0x20] sm:$0xf]
      %v853 = vld [vmem:[%s5 + $0x24] sm:$0xf]
      %v854 = vld [vmem:[%s5 + $0x28] sm:$0xf]
      %v855 = vld [vmem:[%s5 + $0x2c] sm:$0xf]
      %v856 = vld [vmem:[%s5 + $0x30] sm:$0xf]
      %v857 = vld [vmem:[%s5 + $0x34] sm:$0xf]
      %v858 = vld [vmem:[%s5 + $0x38] sm:$0xf]
      %v859 = vld [vmem:[%s5 + $0x3c] sm:$0xf]
      %v860 = vld [vmem:[%s6] sm:$0x1]
      %v862 = vlaneseq
      %v863 = vshrl.u32 %v862, 7
      %v864 = vsub.s32 0, %v863
      %v865 = vrot.slane %v860, %v864
      %v883 = vunpack.c.l.b16 %v844
      %v884 = vunpack.c.l.b16 %v845
      %v885 = vunpack.c.l.b16 %v846
      %v886 = vunpack.c.l.b16 %v847
      %v887 = vunpack.c.l.b16 %v848
      %v888 = vunpack.c.l.b16 %v849
      %v889 = vunpack.c.l.b16 %v850
      %v890 = vunpack.c.l.b16 %v851
      %v891 = vunpack.c.l.b16 %v852
      %v892 = vunpack.c.l.b16 %v853
      %v893 = vunpack.c.l.b16 %v854
      %v894 = vunpack.c.l.b16 %v855
      %v895 = vunpack.c.l.b16 %v856
      %v896 = vunpack.c.l.b16 %v857
      %v897 = vunpack.c.l.b16 %v858
      %v898 = vunpack.c.l.b16 %v859
      %v899 = vpack.c.b16 %v884, %v883
      %v900 = vpack.c.b16 %v886, %v885
      %v901 = vpack.c.b16 %v888, %v887
      %v902 = vpack.c.b16 %v890, %v889
      %v903 = vpack.c.b16 %v892, %v891
      %v904 = vpack.c.b16 %v894, %v893
      %v905 = vpack.c.b16 %v896, %v895
      %v906 = vpack.c.b16 %v898, %v897
      %915 = vmatprep.subr.bf16.mxu0 0
      %916 = vmatpush1.bf16.msra.mxu0 %v899
      %917 = vmatprep.subr.bf16.mxu0 0
      %918 = vmatpush1.bf16.msra.mxu0 %v900
      %919 = vmatprep.subr.bf16.mxu0 0
      %920 = vmatpush1.bf16.msra.mxu0 %v901
      %921 = vmatprep.subr.bf16.mxu0 0
      %922 = vmatpush1.bf16.msra.mxu0 %v902
      %923 = vmatprep.subr.bf16.mxu0 0
      %924 = vmatpush1.bf16.msra.mxu0 %v903
      %925 = vmatprep.subr.bf16.mxu0 0
      %926 = vmatpush1.bf16.msra.mxu0 %v904
      %927 = vmatprep.subr.bf16.mxu0 0
      %928 = vmatpush1.bf16.msra.mxu0 %v905
      %929 = vmatprep.subr.bf16.mxu0 0
      %930 = vmatpush1.bf16.msra.mxu0 %v906
      %931 = vmatprep.subr.bf16.mxu0 0
      %932 = vmatpush1.bf16.msra.mxu0 0
      %933 = vmatprep.subr.bf16.mxu0 0
      %934 = vmatpush1.bf16.msra.mxu0 0
      %935 = vmatprep.subr.bf16.mxu0 0
      %936 = vmatpush1.bf16.msra.mxu0 0
      %937 = vmatprep.subr.bf16.mxu0 0
      %938 = vmatpush1.bf16.msra.mxu0 0
      %939 = vmatprep.subr.bf16.mxu0 0
      %940 = vmatpush1.bf16.msra.mxu0 0
      %941 = vmatprep.subr.bf16.mxu0 0
      %942 = vmatpush1.bf16.msra.mxu0 0
      %943 = vmatprep.subr.bf16.mxu0 0
      %944 = vmatpush1.bf16.msra.mxu0 0
      %945 = vmatprep.subr.bf16.mxu0 0
      %946 = vmatpush1.bf16.msra.mxu0 0
      %947 = vmatprep.mubr.bf16.mxu0 0
      %948 = vmatmul.mubr.bf16.gmra.mrb[0].mxu0 %v843
      %v949 = vpop.f32.mrb[0].mxu0
      %v950 = vadd.f32 %v865, %v949
      %v951 = vpop.f32.mrb[0].mxu0
      %v952 = vpop.f32.mrb[0].mxu0
      %v953 = vadd.f32 %v865, %v952
      %v954 = vpop.f32.mrb[0].mxu0
      %955 = vdwg.mxu0
      %956 = vst [vmem:[%s7] sm:$0xff] %v950
      %957 = vst [vmem:[%s7 + $0x8] sm:$0xff] %v953
    $region41: #{classification_forward.1} parent=1 // pred_fallthru
      _
    // Predicated region
    $region42: #{classification_forward.1} parent=1 // pred_check
      _
    $region43: #{classification_forward.1} parent=1 // pred_check_branch
      %959 = sbr.rel (0) target = $region45
    $region44: #{classification_forward.1} parent=1 // pred_region
      _
    $region45: #{classification_forward.1} parent=1 // pred_fallthru
      _
    // Predicated region
    $region46: #{classification_forward.1} parent=1 // pred_check
      _
    $region47: #{classification_forward.1} parent=1 // pred_check_branch
      %961 = sbr.rel (0) target = $region49
    $region48: #{classification_forward.1} parent=1 // pred_region
      _
    $region49: #{classification_forward.1} parent=1 // pred_fallthru
      _
    %962 = vsyncpa [#allocation4], 1

</llo_original>
